<compile_context>
chip_gen: v7x
topology: tpu7x:2x2x1
jax: 0.10.0
libtpu: 0.0.40
codegen_flags: <defaults>
</compile_context>

<pallas_src>
import math
import functools

import jax
import jax.numpy as jnp
import numpy as np
from jax.experimental import pallas as pl
from jax.experimental.pallas import tpu as pltpu

# ------------------------- settings (small, synthetic) -------------------------
WORD_EMBED = 16
POS_EMBED = 8
INPUT_SIZE = WORD_EMBED + 2 * POS_EMBED          # D = 32
OUT_C = 32                                       # conv output channels
N_REL = 8
VOCAB = 100
POS_LIMIT = 30                                   # pos vocab = 2*POS_LIMIT + 1
LIMIT = 30                                       # piecewise split threshold
WINDOW = 3
FEATURE_SIZE = 3 * OUT_C
K_PAD = 128                                      # conv contraction 3D=96 -> 128

N_BAGS = 2
N_SENT = 3                                       # sentences per bag (fixed)
SEQ_LEN = 16


# ------------------------------- Pallas kernel ---------------------------------
def pcnn_one_kernel(x_ref, m_ref, w_ref, cb_ref, re_ref, rb_ref, o_ref,
                    *, bags_per_chunk, n_sent):
    # x_ref:  (cN, L, K_PAD) f32  window-3 slabs [x[t-1]|x[t]|x[t+1]], zero
    #                             padded 3D=96 -> 128 in glue (lane-dense K)
    # m_ref:  (3, cN, L, C)  f32  left/mid/right masks pre-broadcast over C
    # w_ref:  (K_PAD, C)     f32  conv taps stacked along rows [W0;W1;W2;0]
    # cb_ref: (1, 3C)        f32  [conv_bias_0 | conv_bias_1 | conv_bias_2]
    # re_ref: (3C, R)        f32  r_embed^T * 0.5 (eval dropout folded in)
    # rb_ref: (1, R)         f32  r_bias
    # o_ref:  (cB, R)        f32  per-bag max-over-sentences log-softmax
    n, L, kp = x_ref.shape

    # window-3 "conv over full width" as ONE lane-dense MXU matmul.
    conv = jnp.dot(x_ref[...].reshape(n * L, kp), w_ref[...],
                   preferred_element_type=jnp.float32)              # (cN*L, C)
    c = conv.shape[-1]
    conv = conv.reshape(n, L, c)                                     # (cN, L, C)

    # piecewise masked max-pool over the sequence: per piece one VALU multiply
    # + one cross-sublane reduce (masks already channel-broadcast in glue).
    pooled = [jnp.max(conv * m_ref[s], axis=1) for s in range(3)]    # 3x (cN, C)

    # biases added once, lane-dense (1, 3C); then tanh.
    feat = jnp.tanh(jnp.concatenate(pooled, axis=-1) + cb_ref[...])  # (cN, 3C)

    # score matmul; eval-mode dropout scaling (*0.5) is pre-folded into re.
    scores = (jnp.dot(feat, re_ref[...], preferred_element_type=jnp.float32)
              + rb_ref[...])                                         # (cN, R)

    # log-softmax over relations, then per-bag max over sentences (eval mode).
    mx = jnp.max(scores, axis=-1, keepdims=True)
    logp = scores - mx - jnp.log(
        jnp.sum(jnp.exp(scores - mx), axis=-1, keepdims=True))       # (cN, R)
    o_ref[...] = jnp.max(
        logp.reshape(bags_per_chunk, n_sent, logp.shape[-1]), axis=1)  # (cB, R)


def pcnn_one_bag_logits(x_cat, masks3, w_pad, conv_b_row, r_embed_t_half,
                        r_bias, *, n_bags, n_sent, bag_chunk=None):
    """Per-bag eval-mode log-prob logits.

    Grid iterates over bag-chunks and is marked "parallel" so that, once bags
    are batched (bag_chunk < n_bags, bag_chunk a multiple of 8 or == n_bags),
    v7x can shard chunks across its two TensorCores.  At the toy test size we
    use a single chunk (grid=(1,)).  When scaling N/L, keep
    (x_cat block + masks3 block) * 2 double-buffers well under the v7x scoped
    VMEM (~32 MiB default of 64 MiB physical) or raise vmem_limit_bytes.
    """
    n, L, kp = x_cat.shape
    assert n == n_bags * n_sent
    c = w_pad.shape[-1]
    n_rel = r_embed_t_half.shape[-1]
    if bag_chunk is None:
        bag_chunk = n_bags
    assert n_bags % bag_chunk == 0
    n_chunks = n_bags // bag_chunk
    cn = bag_chunk * n_sent

    kernel = functools.partial(pcnn_one_kernel,
                               bags_per_chunk=bag_chunk, n_sent=n_sent)
    return pl.pallas_call(
        kernel,
        out_shape=jax.ShapeDtypeStruct((n_bags, n_rel), jnp.float32),
        grid_spec=pltpu.PrefetchScalarGridSpec(
            num_scalar_prefetch=0,
            grid=(n_chunks,),
            in_specs=[
                pl.BlockSpec((cn, L, kp), lambda i: (i, 0, 0)),
                pl.BlockSpec((3, cn, L, c), lambda i: (0, i, 0, 0)),
                pl.BlockSpec((kp, c), lambda i: (0, 0)),
                pl.BlockSpec((1, 3 * c), lambda i: (0, 0)),
                pl.BlockSpec((3 * c, n_rel), lambda i: (0, 0)),
                pl.BlockSpec((1, n_rel), lambda i: (0, 0)),
            ],
            out_specs=pl.BlockSpec((bag_chunk, n_rel), lambda i: (i, 0)),
        ),
        compiler_params=pltpu.CompilerParams(
            dimension_semantics=("parallel",)),
    )(x_cat, masks3, w_pad, conv_b_row, r_embed_t_half, r_bias)


# --------------------------------- glue / model ---------------------------------
def embed_sentences(tokens, w2v_tbl, pos1_tbl, pos2_tbl):
    """tokens: [N, L, 3] i32 (word, pos1, pos2) -> x_emb [N, L, D]."""
    w = w2v_tbl[tokens[..., 0]]                    # [N, L, WORD_EMBED]
    p1 = pos1_tbl[tokens[..., 1]]                  # [N, L, POS_EMBED]
    p2 = pos2_tbl[tokens[..., 2]]                  # [N, L, POS_EMBED]
    return jnp.concatenate([w, p1, p2], axis=-1).astype(jnp.float32)


@jax.jit
def pcnn_one_forward(tokens, params):
    """tokens: [N_BAGS, N_SENT, L, 3] i32 -> [N_BAGS, N_REL] (eval mode)."""
    nb, ns, L, _ = tokens.shape
    n = nb * ns
    flat = tokens.reshape(n, L, 3)
    x_emb = embed_sentences(flat, params["w2v"], params["pos1"], params["pos2"])

    # The PyTorch Conv1d has padding=(1, 0): the sequence axis is padded by 1
    # on BOTH ends (the embedding axis by 0).  Build the window-3 slab
    # [x[t-1] | x[t] | x[t+1]] here (fuses with the gathers), then zero-pad the
    # contraction dim 3D=96 -> 128 so the kernel's conv matmul is lane-dense.
    x_pad = jnp.pad(x_emb, ((0, 0), (1, 1), (0, 0)))
    x_cat = jnp.concatenate(
        [x_pad[:, 0:L, :], x_pad[:, 1:L + 1, :], x_pad[:, 2:L + 2, :]], axis=-1)
    x_cat = jnp.pad(x_cat, ((0, 0), (0, 0), (0, K_PAD - x_cat.shape[-1])))

    # piecewise left/mid/right masks, pre-broadcast over channels in glue so
    # the kernel never touches a 3-wide lane dim.
    c = params["conv_w_pad"].shape[-1]
    p1 = flat[..., 1]
    p2 = flat[..., 2]
    m1 = p1 >= LIMIT
    m2 = p2 >= LIMIT
    left = jnp.logical_and(m1, m2)
    right = jnp.logical_and(jnp.logical_not(m1), jnp.logical_not(m2))
    mid = jnp.logical_not(jnp.logical_or(left, right))
    masks3 = jnp.broadcast_to(
        jnp.stack([left, mid, right], axis=0).astype(jnp.float32)[..., None],
        (3, n, L, c))                                                # [3,N,L,C]

    return pcnn_one_bag_logits(
        x_cat, masks3, params["conv_w_pad"], params["conv_b_row"],
        params["r_embed_t_half"], params["r_bias"], n_bags=nb, n_sent=ns)


# --------------------------- pure-numpy reference check ---------------------------
def reference_forward(tokens, params_ref):
    nb, ns, L, _ = tokens.shape
    flat = tokens.reshape(nb * ns, L, 3)
    x_emb = np.asarray(embed_sentences(flat, params_ref["w2v"],
                                       params_ref["pos1"], params_ref["pos2"]))
    W = np.asarray(params_ref["conv_w"])           # (3, D, C)
    cb = np.asarray(params_ref["conv_b"])          # (3, C)
    rT = np.asarray(params_ref["r_embed"]).T       # (3C, R)
    rb = np.asarray(params_ref["r_bias"])
    outs = []
    for idx in range(nb * ns):
        x = x_emb[idx]
        xp = np.concatenate([np.zeros((1, x.shape[1]), np.float32), x[:-1]], 0)
        xn = np.concatenate([x[1:], np.zeros((1, x.shape[1]), np.float32)], 0)
        conv = xp @ W[0] + x @ W[1] + xn @ W[2]
        p1 = np.asarray(flat[idx, :, 1]); p2 = np.asarray(flat[idx, :, 2])
        m1 = p1 >= LIMIT; m2 = p2 >= LIMIT
        left = (m1 & m2).astype(np.float32)[:, None]
        right = ((~m1) & (~m2)).astype(np.float32)[:, None]
        mid = 1.0 - left - right
        lf = (conv * left).max(0) + cb[0]
        mf = (conv * mid).max(0) + cb[1]
        rf = (conv * right).max(0) + cb[2]
        feat = np.tanh(np.concatenate([lf, mf, rf]))[None, :]
        outs.append(feat @ rT * 0.5 + rb)
    scores = np.concatenate(outs, 0).reshape(nb, ns, N_REL)
    mx = scores.max(-1, keepdims=True)
    logp = scores - mx - np.log(np.exp(scores - mx).sum(-1, keepdims=True))
    return logp.max(axis=1)


# ------------------------------------ main --------------------------------------
if __name__ == "__main__":
    key = jax.random.PRNGKey(0)
    ks = jax.random.split(key, 10)

    con = math.sqrt(6.0 / (OUT_C + N_REL))
    con1 = math.sqrt(6.0 / ((POS_EMBED + WORD_EMBED) * WINDOW))

    # parameters (deterministic, matching the module's init distributions)
    w2v_tbl = jax.random.normal(ks[0], (VOCAB, WORD_EMBED), jnp.float32)
    pos1_tbl = jax.random.normal(ks[1], (2 * POS_LIMIT + 1, POS_EMBED), jnp.float32)
    pos2_tbl = jax.random.normal(ks[2], (2 * POS_LIMIT + 1, POS_EMBED), jnp.float32)
    # PyTorch conv weight is [OUT_C, 1, WINDOW, D]; kernel wants taps stacked
    # along rows [W0; W1; W2], zero-padded from 3D=96 to 128 rows.
    conv_w_pt = jax.random.uniform(ks[3], (OUT_C, WINDOW, INPUT_SIZE),
                                   jnp.float32, -con1, con1)
    conv_w = jnp.transpose(conv_w_pt, (1, 2, 0))                 # (3, D, C)
    conv_w_cat = conv_w.reshape(WINDOW * INPUT_SIZE, OUT_C)      # (3D, C)
    conv_w_pad = jnp.pad(conv_w_cat,
                         ((0, K_PAD - WINDOW * INPUT_SIZE), (0, 0)))  # (128, C)
    conv_b = jax.random.uniform(ks[4], (3, OUT_C), jnp.float32, -con1, con1)
    conv_b_row = conv_b.reshape(1, 3 * OUT_C)                    # [b0 | b1 | b2]
    r_embed = jax.random.uniform(ks[5], (N_REL, FEATURE_SIZE), jnp.float32, -con, con)
    r_bias = jax.random.uniform(ks[6], (1, N_REL), jnp.float32, -con, con)

    params = dict(w2v=w2v_tbl, pos1=pos1_tbl, pos2=pos2_tbl,
                  conv_w_pad=conv_w_pad, conv_b_row=conv_b_row,
                  # eval-mode dropout *0.5 folded into the score weights once:
                  r_embed_t_half=r_embed.T * 0.5, r_bias=r_bias)
    params_ref = dict(w2v=w2v_tbl, pos1=pos1_tbl, pos2=pos2_tbl,
                      conv_w=conv_w, conv_b=conv_b,
                      r_embed=r_embed, r_bias=r_bias)

    # synthetic bags: [N_BAGS, N_SENT, L, 3] int32 (word id, pos1 id, pos2 id)
    word_ids = jax.random.randint(ks[7], (N_BAGS, N_SENT, SEQ_LEN, 1), 0, VOCAB)
    pos_ids = jax.random.randint(ks[8], (N_BAGS, N_SENT, SEQ_LEN, 2), 0,
                                 2 * POS_LIMIT + 1)
    tokens = jnp.concatenate([word_ids, pos_ids], axis=-1).astype(jnp.int32)

    out = pcnn_one_forward(tokens, params)
    out = jax.block_until_ready(out)

    ref = reference_forward(tokens, params_ref)
    assert out.shape == (N_BAGS, N_REL)
    np.testing.assert_allclose(np.asarray(out), ref, rtol=1e-4, atol=1e-4)
    print("KERNEL_OK")
</pallas_src>

<mosaic_0001>
module attributes {stable_mosaic.version = 11 : i64} {
  func.func @pcnn_one_kernel(%arg0: i32, %arg1: memref<6x16x128xf32, #tpu.memory_space<vmem>>, %arg2: memref<3x6x16x32xf32, #tpu.memory_space<vmem>>, %arg3: memref<128x32xf32, #tpu.memory_space<vmem>>, %arg4: memref<1x96xf32, #tpu.memory_space<vmem>>, %arg5: memref<96x8xf32, #tpu.memory_space<vmem>>, %arg6: memref<1x8xf32, #tpu.memory_space<vmem>>, %arg7: memref<2x8xf32, #tpu.memory_space<vmem>>) attributes {dimension_semantics = [#tpu.dimension_semantics<parallel>], iteration_bounds = array<i64: 1>, scalar_prefetch = 0 : i64, scratch_operands = 0 : i64, tpu.core_type = #tpu.core_type<tc>, window_params = [{transform_indices = @transform_0, window_bounds = array<i64: 6, 16, 128>}, {transform_indices = @transform_1, window_bounds = array<i64: 3, 6, 16, 32>}, {pipeline_mode = #tpu.pipeline_mode<synchronous>, transform_indices = @transform_2, window_bounds = array<i64: 128, 32>}, {pipeline_mode = #tpu.pipeline_mode<synchronous>, transform_indices = @transform_3, window_bounds = array<i64: 1, 96>}, {pipeline_mode = #tpu.pipeline_mode<synchronous>, transform_indices = @transform_4, window_bounds = array<i64: 96, 8>}, {pipeline_mode = #tpu.pipeline_mode<synchronous>, transform_indices = @transform_5, window_bounds = array<i64: 1, 8>}, {transform_indices = @transform_6, window_bounds = array<i64: 2, 8>}]} {
    %c0 = arith.constant 0 : index
    %c0_0 = arith.constant 0 : index
    %c0_1 = arith.constant 0 : index
    %0 = vector.load %arg1[%c0, %c0_0, %c0_1] : memref<6x16x128xf32, #tpu.memory_space<vmem>>, vector<6x16x128xf32>
    %1 = vector.shape_cast %0 : vector<6x16x128xf32> to vector<96x128xf32>
    %c0_2 = arith.constant 0 : index
    %c0_3 = arith.constant 0 : index
    %2 = vector.load %arg3[%c0_2, %c0_3] : memref<128x32xf32, #tpu.memory_space<vmem>>, vector<128x32xf32>
    %cst = arith.constant dense<0.000000e+00> : vector<96x32xf32>
    %3 = tpu.matmul %1, %2, %cst {dimension_numbers = #tpu.dot_dimension_numbers<[1], [0], [0], [1], [0, 0, 1, 1], [], []>} : vector<96x128xf32>, vector<128x32xf32>, vector<96x32xf32> -> vector<96x32xf32>
    %4 = vector.shape_cast %3 : vector<96x32xf32> to vector<6x16x32xf32>
    %c0_4 = arith.constant 0 : index
    %c0_5 = arith.constant 0 : index
    %c0_6 = arith.constant 0 : index
    %c0_7 = arith.constant 0 : index
    %5 = vector.load %arg2[%c0_4, %c0_5, %c0_6, %c0_7] : memref<3x6x16x32xf32, #tpu.memory_space<vmem>>, vector<1x6x16x32xf32>
    %6 = vector.shape_cast %5 : vector<1x6x16x32xf32> to vector<6x16x32xf32>
    %7 = arith.mulf %4, %6 : vector<6x16x32xf32>
    %cst_8 = arith.constant dense<0xFF800000> : vector<6x32xf32>
    %8 = vector.multi_reduction <maximumf>, %7, %cst_8 [1] : vector<6x16x32xf32> to vector<6x32xf32>
    %c1 = arith.constant 1 : index
    %c0_9 = arith.constant 0 : index
    %c0_10 = arith.constant 0 : index
    %c0_11 = arith.constant 0 : index
    %9 = vector.load %arg2[%c1, %c0_9, %c0_10, %c0_11] : memref<3x6x16x32xf32, #tpu.memory_space<vmem>>, vector<1x6x16x32xf32>
    %10 = vector.shape_cast %9 : vector<1x6x16x32xf32> to vector<6x16x32xf32>
    %11 = arith.mulf %4, %10 : vector<6x16x32xf32>
    %cst_12 = arith.constant dense<0xFF800000> : vector<6x32xf32>
    %12 = vector.multi_reduction <maximumf>, %11, %cst_12 [1] : vector<6x16x32xf32> to vector<6x32xf32>
    %c2 = arith.constant 2 : index
    %c0_13 = arith.constant 0 : index
    %c0_14 = arith.constant 0 : index
    %c0_15 = arith.constant 0 : index
    %13 = vector.load %arg2[%c2, %c0_13, %c0_14, %c0_15] : memref<3x6x16x32xf32, #tpu.memory_space<vmem>>, vector<1x6x16x32xf32>
    %14 = vector.shape_cast %13 : vector<1x6x16x32xf32> to vector<6x16x32xf32>
    %15 = arith.mulf %4, %14 : vector<6x16x32xf32>
    %cst_16 = arith.constant dense<0xFF800000> : vector<6x32xf32>
    %16 = vector.multi_reduction <maximumf>, %15, %cst_16 [1] : vector<6x16x32xf32> to vector<6x32xf32>
    %17 = tpu.concatenate %8, %12, %16 in 1 : vector<6x32xf32>, vector<6x32xf32>, vector<6x32xf32> -> vector<6x96xf32>
    %c0_17 = arith.constant 0 : index
    %c0_18 = arith.constant 0 : index
    %18 = vector.load %arg4[%c0_17, %c0_18] : memref<1x96xf32, #tpu.memory_space<vmem>>, vector<1x96xf32>
    %19 = vector.broadcast %18 : vector<1x96xf32> to vector<6x96xf32>
    %20 = arith.addf %17, %19 : vector<6x96xf32>
    %21 = math.tanh %20 : vector<6x96xf32>
    %c0_19 = arith.constant 0 : index
    %c0_20 = arith.constant 0 : index
    %22 = vector.load %arg5[%c0_19, %c0_20] : memref<96x8xf32, #tpu.memory_space<vmem>>, vector<96x8xf32>
    %cst_21 = arith.constant dense<0.000000e+00> : vector<6x8xf32>
    %23 = tpu.matmul %21, %22, %cst_21 {dimension_numbers = #tpu.dot_dimension_numbers<[1], [0], [0], [1], [0, 0, 1, 1], [], []>} : vector<6x96xf32>, vector<96x8xf32>, vector<6x8xf32> -> vector<6x8xf32>
    %c0_22 = arith.constant 0 : index
    %c0_23 = arith.constant 0 : index
    %24 = vector.load %arg6[%c0_22, %c0_23] : memref<1x8xf32, #tpu.memory_space<vmem>>, vector<1x8xf32>
    %25 = vector.broadcast %24 : vector<1x8xf32> to vector<6x8xf32>
    %26 = arith.addf %23, %25 : vector<6x8xf32>
    %cst_24 = arith.constant dense<0xFF800000> : vector<6xf32>
    %27 = vector.multi_reduction <maximumf>, %26, %cst_24 [1] : vector<6x8xf32> to vector<6xf32>
    %28 = vector.shape_cast %27 : vector<6xf32> to vector<6x1xf32>
    %29 = vector.broadcast %28 : vector<6x1xf32> to vector<6x8xf32>
    %30 = arith.subf %26, %29 : vector<6x8xf32>
    %31 = vector.broadcast %28 : vector<6x1xf32> to vector<6x8xf32>
    %32 = arith.subf %26, %31 : vector<6x8xf32>
    %33 = math.exp %32 : vector<6x8xf32>
    %cst_25 = arith.constant dense<0.000000e+00> : vector<6xf32>
    %34 = vector.multi_reduction <add>, %33, %cst_25 [1] : vector<6x8xf32> to vector<6xf32>
    %35 = vector.shape_cast %34 : vector<6xf32> to vector<6x1xf32>
    %36 = math.log %35 : vector<6x1xf32>
    %37 = vector.broadcast %36 : vector<6x1xf32> to vector<6x8xf32>
    %38 = arith.subf %30, %37 : vector<6x8xf32>
    %39 = vector.shape_cast %38 : vector<6x8xf32> to vector<2x3x8xf32>
    %cst_26 = arith.constant dense<0xFF800000> : vector<2x8xf32>
    %40 = vector.multi_reduction <maximumf>, %39, %cst_26 [1] : vector<2x3x8xf32> to vector<2x8xf32>
    %c0_27 = arith.constant 0 : index
    %c0_28 = arith.constant 0 : index
    %41 = vector.load %arg7[%c0_27, %c0_28] : memref<2x8xf32, #tpu.memory_space<vmem>>, vector<2x8xf32>
    tpu.vector_store %arg7[%c0_27, %c0_28], %40 {strides = array<i32>} : memref<2x8xf32, #tpu.memory_space<vmem>>, vector<2x8xf32>,
    return
  }
  func.func @transform_0(%arg0: i32) -> (i32, i32, i32) {
    %c0_i32 = arith.constant 0 : i32
    %c0_i32_0 = arith.constant 0 : i32
    %c0_i32_1 = arith.constant 0 : i32
    return %arg0, %c0_i32, %c0_i32_0 : i32, i32, i32
  }
  func.func @transform_1(%arg0: i32) -> (i32, i32, i32, i32) {
    %c0_i32 = arith.constant 0 : i32
    %c0_i32_0 = arith.constant 0 : i32
    %c0_i32_1 = arith.constant 0 : i32
    %c0_i32_2 = arith.constant 0 : i32
    return %c0_i32, %arg0, %c0_i32_0, %c0_i32_1 : i32, i32, i32, i32
  }
  func.func @transform_2(%arg0: i32) -> (i32, i32) {
    %c0_i32 = arith.constant 0 : i32
    %c0_i32_0 = arith.constant 0 : i32
    %c0_i32_1 = arith.constant 0 : i32
    return %c0_i32, %c0_i32_0 : i32, i32
  }
  func.func @transform_3(%arg0: i32) -> (i32, i32) {
    %c0_i32 = arith.constant 0 : i32
    %c0_i32_0 = arith.constant 0 : i32
    %c0_i32_1 = arith.constant 0 : i32
    return %c0_i32, %c0_i32_0 : i32, i32
  }
  func.func @transform_4(%arg0: i32) -> (i32, i32) {
    %c0_i32 = arith.constant 0 : i32
    %c0_i32_0 = arith.constant 0 : i32
    %c0_i32_1 = arith.constant 0 : i32
    return %c0_i32, %c0_i32_0 : i32, i32
  }
  func.func @transform_5(%arg0: i32) -> (i32, i32) {
    %c0_i32 = arith.constant 0 : i32
    %c0_i32_0 = arith.constant 0 : i32
    %c0_i32_1 = arith.constant 0 : i32
    return %c0_i32, %c0_i32_0 : i32, i32
  }
  func.func @transform_6(%arg0: i32) -> (i32, i32) {
    %c0_i32 = arith.constant 0 : i32
    %c0_i32_0 = arith.constant 0 : i32
    return %arg0, %c0_i32 : i32, i32
  }
}

</mosaic_0001>

<llo_original>
// kernel: pcnn_one_forward.1
$region0: #{pcnn_one_forward.1}
  #allocation0 [shape = 'u32[]', space=smem, size = 0x4, offset = 0x4, fixed_abs, tag = 'smem constant byte address 0x4 - core index']
  #allocation1 [shape = 'u32[144,128]{1,0:T(1,128)}', space=vmem, size = 0x12000, scoped, tag = 'internal scratch']
  %s0 = inlined_call_operand.vmem [shape: f32[6,16,128], index: 0, kind: input, shape index: {}]
  %s1 = inlined_call_operand.vmem [shape: f32[3,6,16,32], index: 1, kind: input, shape index: {}]
  %s2 = inlined_call_operand.vmem [shape: f32[128,32], index: 2, kind: input, shape index: {}]
  %s3 = inlined_call_operand.vmem [shape: f32[1,96], index: 3, kind: input, shape index: {}]
  %s4 = inlined_call_operand.vmem [shape: f32[96,8], index: 4, kind: input, shape index: {}]
  %s5 = inlined_call_operand.vmem [shape: f32[1,8], index: 5, kind: input, shape index: {}]
  %s6 = inlined_call_operand.hbm [shape: f32[2,8], index: 6, kind: output, shape index: {}]
  %s7 = sld [smem:[#allocation0]]
  $region34: #{pcnn_one_forward.1} parent=0
    _
  %s9 = ssub.s32 1, %s7
  %s10 = scalar_select 0, %s9, %s7
  $region1: #{pcnn_one_forward.1} parent=0
    #allocation2 [shape = 'u8[1024]{0}', space=vmem, size = 0x400, scoped, tag = 'output window, operand 0, single buffered']
    #allocation3 [shape = 's32[1]{0}', space=sflag, size = 0x4, scoped, tag = 'scoped memory for pcnn_one_forward.1']
    %11 = vsyncpa [#allocation3], 0
    // Predicated region
    $region2: #{pcnn_one_forward.1} parent=1 // pred_check
      _
    $region3: #{pcnn_one_forward.1} parent=1 // pred_check_branch
      %13 = sbr.rel (0) target = $region5
    $region4: #{pcnn_one_forward.1} parent=1 // pred_region
      _
    $region5: #{pcnn_one_forward.1} parent=1 // pred_fallthru
      _
    // Predicated region
    $region6: #{pcnn_one_forward.1} parent=1 // pred_check
      _
    $region7: #{pcnn_one_forward.1} parent=1 // pred_check_branch
      %15 = sbr.rel (0) target = $region9
    $region8: #{pcnn_one_forward.1} parent=1 // pred_region
      _
    $region9: #{pcnn_one_forward.1} parent=1 // pred_fallthru
      _
    // Predicated region
    $region10: #{pcnn_one_forward.1} parent=1 // pred_check
      _
    $region11: #{pcnn_one_forward.1} parent=1 // pred_check_branch
      %17 = sbr.rel (0) target = $region13
    $region12: #{pcnn_one_forward.1} parent=1 // pred_region
      _
    $region13: #{pcnn_one_forward.1} parent=1 // pred_fallthru
      _
    // Predicated region
    $region14: #{pcnn_one_forward.1} parent=1 // pred_check
      _
    $region15: #{pcnn_one_forward.1} parent=1 // pred_check_branch
      %19 = sbr.rel (0) target = $region17
    $region16: #{pcnn_one_forward.1} parent=1 // pred_region
      _
    $region17: #{pcnn_one_forward.1} parent=1 // pred_fallthru
      _
    // Predicated region
    $region18: #{pcnn_one_forward.1} parent=1 // pred_check
      _
    $region19: #{pcnn_one_forward.1} parent=1 // pred_check_branch
      %21 = sbr.rel (0) target = $region21
    $region20: #{pcnn_one_forward.1} parent=1 // pred_region
      _
    $region21: #{pcnn_one_forward.1} parent=1 // pred_fallthru
      _
    // Predicated region
    $region22: #{pcnn_one_forward.1} parent=1 // pred_check
      _
    $region23: #{pcnn_one_forward.1} parent=1 // pred_check_branch
      %23 = sbr.rel (0) target = $region25
    $region24: #{pcnn_one_forward.1} parent=1 // pred_region
      _
    $region25: #{pcnn_one_forward.1} parent=1 // pred_fallthru
      _
    %v24 = vld [vmem:[%s0] sm:$0xff]
    %v25 = vld [vmem:[%s0 + $0x8] sm:$0xff]
    %v26 = vld [vmem:[%s0 + $0x10] sm:$0xff]
    %v27 = vld [vmem:[%s0 + $0x18] sm:$0xff]
    %v28 = vld [vmem:[%s0 + $0x20] sm:$0xff]
    %v29 = vld [vmem:[%s0 + $0x28] sm:$0xff]
    %v30 = vld [vmem:[%s0 + $0x30] sm:$0xff]
    %v31 = vld [vmem:[%s0 + $0x38] sm:$0xff]
    %v32 = vld [vmem:[%s0 + $0x40] sm:$0xff]
    %v33 = vld [vmem:[%s0 + $0x48] sm:$0xff]
    %v34 = vld [vmem:[%s0 + $0x50] sm:$0xff]
    %v35 = vld [vmem:[%s0 + $0x58] sm:$0xff]
    %v36 = vld [vmem:[%s2] sm:$0xff]
    %v37 = vld [vmem:[%s2 + $0x8] sm:$0xff]
    %v38 = vld [vmem:[%s2 + $0x10] sm:$0xff]
    %v39 = vld [vmem:[%s2 + $0x18] sm:$0xff]
    %v40 = vld [vmem:[%s2 + $0x20] sm:$0xff]
    %v41 = vld [vmem:[%s2 + $0x28] sm:$0xff]
    %v42 = vld [vmem:[%s2 + $0x30] sm:$0xff]
    %v43 = vld [vmem:[%s2 + $0x38] sm:$0xff]
    %v44 = vld [vmem:[%s2 + $0x40] sm:$0xff]
    %v45 = vld [vmem:[%s2 + $0x48] sm:$0xff]
    %v46 = vld [vmem:[%s2 + $0x50] sm:$0xff]
    %v47 = vld [vmem:[%s2 + $0x58] sm:$0xff]
    %v48 = vld [vmem:[%s2 + $0x60] sm:$0xff]
    %v49 = vld [vmem:[%s2 + $0x68] sm:$0xff]
    %v50 = vld [vmem:[%s2 + $0x70] sm:$0xff]
    %v51 = vld [vmem:[%s2 + $0x78] sm:$0xff]
    %52 = vmatprep.subr.mxu0 0.0
    %53 = vmatpush1.msra.mxu0 %v36
    %54 = vmatprep.subr.mxu0 0.0
    %55 = vmatpush1.msra.mxu0 %v37
    %56 = vmatprep.subr.mxu0 0.0
    %57 = vmatpush1.msra.mxu0 %v38
    %58 = vmatprep.subr.mxu0 0.0
    %59 = vmatpush1.msra.mxu0 %v39
    %60 = vmatprep.subr.mxu0 0.0
    %61 = vmatpush1.msra.mxu0 %v40
    %62 = vmatprep.subr.mxu0 0.0
    %63 = vmatpush1.msra.mxu0 %v41
    %64 = vmatprep.subr.mxu0 0.0
    %65 = vmatpush1.msra.mxu0 %v42
    %66 = vmatprep.subr.mxu0 0.0
    %67 = vmatpush1.msra.mxu0 %v43
    %68 = vmatprep.subr.mxu0 0.0
    %69 = vmatpush1.msra.mxu0 %v44
    %70 = vmatprep.subr.mxu0 0.0
    %71 = vmatpush1.msra.mxu0 %v45
    %72 = vmatprep.subr.mxu0 0.0
    %73 = vmatpush1.msra.mxu0 %v46
    %74 = vmatprep.subr.mxu0 0.0
    %75 = vmatpush1.msra.mxu0 %v47
    %76 = vmatprep.subr.mxu0 0.0
    %77 = vmatpush1.msra.mxu0 %v48
    %78 = vmatprep.subr.mxu0 0.0
    %79 = vmatpush1.msra.mxu0 %v49
    %80 = vmatprep.subr.mxu0 0.0
    %81 = vmatpush1.msra.mxu0 %v50
    %82 = vmatprep.subr.mxu0 0.0
    %83 = vmatpush1.msra.mxu0 %v51
    %84 = vmatprep.subr.mxu0 0.0
    %85 = vmatpush1.msra.mxu0 0.0
    %86 = vmatprep.subr.mxu0 0.0
    %87 = vmatpush1.msra.mxu0 0.0
    %88 = vmatprep.subr.mxu0 0.0
    %89 = vmatpush1.msra.mxu0 0.0
    %90 = vmatprep.subr.mxu0 0.0
    %91 = vmatpush1.msra.mxu0 0.0
    %92 = vmatprep.subr.mxu0 0.0
    %93 = vmatpush1.msra.mxu0 0.0
    %94 = vmatprep.subr.mxu0 0.0
    %95 = vmatpush1.msra.mxu0 0.0
    %96 = vmatprep.subr.mxu0 0.0
    %97 = vmatpush1.msra.mxu0 0.0
    %98 = vmatprep.subr.mxu0 0.0
    %99 = vmatpush1.msra.mxu0 0.0
    %100 = vmatprep.subr.mxu0 0.0
    %101 = vmatpush1.msra.mxu0 0.0
    %102 = vmatprep.subr.mxu0 0.0
    %103 = vmatpush1.msra.mxu0 0.0
    %104 = vmatprep.subr.mxu0 0.0
    %105 = vmatpush1.msra.mxu0 0.0
    %106 = vmatprep.subr.mxu0 0.0
    %107 = vmatpush1.msra.mxu0 0.0
    %108 = vmatprep.subr.mxu0 0.0
    %109 = vmatpush1.msra.mxu0 0.0
    %110 = vmatprep.subr.mxu0 0.0
    %111 = vmatpush1.msra.mxu0 0.0
    %112 = vmatprep.subr.mxu0 0.0
    %113 = vmatpush1.msra.mxu0 0.0
    %114 = vmatprep.subr.mxu0 0.0
    %115 = vmatpush1.msra.mxu0 0.0
    %116 = vmatprep.mubr.f32.mxu0 0.0
    %117 = vmatmul.mubr.f32.gmra.mrb[0].mxu0 %v24
    %v118 = vpop.f32.mrb[0].mxu0
    %v119 = vadd.f32 0.0, %v118
    %v120 = vpop.f32.mrb[0].mxu0
    %121 = vmatprep.mubr.f32.mxu0 0.0
    %122 = vmatmul.mubr.f32.gmra.mrb[0].mxu0 %v25
    %v123 = vpop.f32.mrb[0].mxu0
    %v124 = vadd.f32 0.0, %v123
    %v125 = vpop.f32.mrb[0].mxu0
    %126 = vmatprep.mubr.f32.mxu0 0.0
    %127 = vmatmul.mubr.f32.gmra.mrb[0].mxu0 %v26
    %v128 = vpop.f32.mrb[0].mxu0
    %v129 = vadd.f32 0.0, %v128
    %v130 = vpop.f32.mrb[0].mxu0
    %131 = vmatprep.mubr.f32.mxu0 0.0
    %132 = vmatmul.mubr.f32.gmra.mrb[0].mxu0 %v27
    %v133 = vpop.f32.mrb[0].mxu0
    %v134 = vadd.f32 0.0, %v133
    %v135 = vpop.f32.mrb[0].mxu0
    %136 = vmatprep.mubr.f32.mxu0 0.0
    %137 = vmatmul.mubr.f32.gmra.mrb[0].mxu0 %v28
    %v138 = vpop.f32.mrb[0].mxu0
    %v139 = vadd.f32 0.0, %v138
    %v140 = vpop.f32.mrb[0].mxu0
    %141 = vmatprep.mubr.f32.mxu0 0.0
    %142 = vmatmul.mubr.f32.gmra.mrb[0].mxu0 %v29
    %v143 = vpop.f32.mrb[0].mxu0
    %v144 = vadd.f32 0.0, %v143
    %v145 = vpop.f32.mrb[0].mxu0
    %146 = vmatprep.mubr.f32.mxu0 0.0
    %147 = vmatmul.mubr.f32.gmra.mrb[0].mxu0 %v30
    %v148 = vpop.f32.mrb[0].mxu0
    %v149 = vadd.f32 0.0, %v148
    %v150 = vpop.f32.mrb[0].mxu0
    %151 = vmatprep.mubr.f32.mxu0 0.0
    %152 = vmatmul.mubr.f32.gmra.mrb[0].mxu0 %v31
    %v153 = vpop.f32.mrb[0].mxu0
    %v154 = vadd.f32 0.0, %v153
    %v155 = vpop.f32.mrb[0].mxu0
    %156 = vmatprep.mubr.f32.mxu0 0.0
    %157 = vmatmul.mubr.f32.gmra.mrb[0].mxu0 %v32
    %v158 = vpop.f32.mrb[0].mxu0
    %v159 = vadd.f32 0.0, %v158
    %v160 = vpop.f32.mrb[0].mxu0
    %161 = vmatprep.mubr.f32.mxu0 0.0
    %162 = vmatmul.mubr.f32.gmra.mrb[0].mxu0 %v33
    %v163 = vpop.f32.mrb[0].mxu0
    %v164 = vadd.f32 0.0, %v163
    %v165 = vpop.f32.mrb[0].mxu0
    %166 = vmatprep.mubr.f32.mxu0 0.0
    %167 = vmatmul.mubr.f32.gmra.mrb[0].mxu0 %v34
    %v168 = vpop.f32.mrb[0].mxu0
    %v169 = vadd.f32 0.0, %v168
    %v170 = vpop.f32.mrb[0].mxu0
    %171 = vmatprep.mubr.f32.mxu0 0.0
    %172 = vmatmul.mubr.f32.gmra.mrb[0].mxu0 %v35
    %v173 = vpop.f32.mrb[0].mxu0
    %v174 = vadd.f32 0.0, %v173
    %v175 = vpop.f32.mrb[0].mxu0
    %176 = vdwg.mxu0
    %v177 = vld [vmem:[%s1] sm:$0xff]
    %v178 = vld [vmem:[%s1 + $0x8] sm:$0xff]
    %v179 = vld [vmem:[%s1 + $0x10] sm:$0xff]
    %v180 = vld [vmem:[%s1 + $0x18] sm:$0xff]
    %v181 = vld [vmem:[%s1 + $0x20] sm:$0xff]
    %v182 = vld [vmem:[%s1 + $0x28] sm:$0xff]
    %v183 = vld [vmem:[%s1 + $0x30] sm:$0xff]
    %v184 = vld [vmem:[%s1 + $0x38] sm:$0xff]
    %v185 = vld [vmem:[%s1 + $0x40] sm:$0xff]
    %v186 = vld [vmem:[%s1 + $0x48] sm:$0xff]
    %v187 = vld [vmem:[%s1 + $0x50] sm:$0xff]
    %v188 = vld [vmem:[%s1 + $0x58] sm:$0xff]
    %v189 = vmul.f32 %v119, %v177
    %v190 = vmul.f32 %v124, %v178
    %v191 = vmul.f32 %v129, %v179
    %v192 = vmul.f32 %v134, %v180
    %v193 = vmul.f32 %v139, %v181
    %v194 = vmul.f32 %v144, %v182
    %v195 = vmul.f32 %v149, %v183
    %v196 = vmul.f32 %v154, %v184
    %v197 = vmul.f32 %v159, %v185
    %v198 = vmul.f32 %v164, %v186
    %v199 = vmul.f32 %v169, %v187
    %v200 = vmul.f32 %v174, %v188
    %vm201 = vcmask 261120
    %v202 = vsel %vm201, %v189, -inf
    %v203 = vsel %vm201, %v190, -inf
    %v204 = vmax.f32 %v202, %v203
    %v205 = vrot.slane %v204, 4
    %v206 = vmax.f32 %v204, %v205
    %v207 = vrot.slane %v206, 2
    %v208 = vmax.f32 %v206, %v207
    %v209 = vrot.slane %v208, 1
    %v210 = vmax.f32 %v208, %v209
    %v211 = vsel %vm201, %v191, -inf
    %v212 = vsel %vm201, %v192, -inf
    %v213 = vmax.f32 %v211, %v212
    %v214 = vrot.slane %v213, 4
    %v215 = vmax.f32 %v213, %v214
    %v216 = vrot.slane %v215, 2
    %v217 = vmax.f32 %v215, %v216
    %v218 = vrot.slane %v217, 1
    %v219 = vmax.f32 %v217, %v218
    %v220 = vsel %vm201, %v193, -inf
    %v221 = vsel %vm201, %v194, -inf
    %v222 = vmax.f32 %v220, %v221
    %v223 = vrot.slane %v222, 4
    %v224 = vmax.f32 %v222, %v223
    %v225 = vrot.slane %v224, 2
    %v226 = vmax.f32 %v224, %v225
    %v227 = vrot.slane %v226, 1
    %v228 = vmax.f32 %v226, %v227
    %v229 = vsel %vm201, %v195, -inf
    %v230 = vsel %vm201, %v196, -inf
    %v231 = vmax.f32 %v229, %v230
    %v232 = vrot.slane %v231, 4
    %v233 = vmax.f32 %v231, %v232
    %v234 = vrot.slane %v233, 2
    %v235 = vmax.f32 %v233, %v234
    %v236 = vrot.slane %v235, 1
    %v237 = vmax.f32 %v235, %v236
    %v238 = vsel %vm201, %v197, -inf
    %v239 = vsel %vm201, %v198, -inf
    %v240 = vmax.f32 %v238, %v239
    %v241 = vrot.slane %v240, 4
    %v242 = vmax.f32 %v240, %v241
    %v243 = vrot.slane %v242, 2
    %v244 = vmax.f32 %v242, %v243
    %v245 = vrot.slane %v244, 1
    %v246 = vmax.f32 %v244, %v245
    %v247 = vsel %vm201, %v199, -inf
    %v248 = vsel %vm201, %v200, -inf
    %v249 = vmax.f32 %v247, %v248
    %v250 = vrot.slane %v249, 4
    %v251 = vmax.f32 %v249, %v250
    %v252 = vrot.slane %v251, 2
    %v253 = vmax.f32 %v251, %v252
    %v254 = vrot.slane %v253, 1
    %v255 = vmax.f32 %v253, %v254
    %s256 = scalar_lea.vmem %s1, 96
    %v257 = vld [vmem:[%s256] sm:$0xff]
    %v258 = vld [vmem:[%s256 + $0x8] sm:$0xff]
    %v259 = vld [vmem:[%s256 + $0x10] sm:$0xff]
    %v260 = vld [vmem:[%s256 + $0x18] sm:$0xff]
    %v261 = vld [vmem:[%s256 + $0x20] sm:$0xff]
    %v262 = vld [vmem:[%s256 + $0x28] sm:$0xff]
    %v263 = vld [vmem:[%s256 + $0x30] sm:$0xff]
    %v264 = vld [vmem:[%s256 + $0x38] sm:$0xff]
    %v265 = vld [vmem:[%s256 + $0x40] sm:$0xff]
    %v266 = vld [vmem:[%s256 + $0x48] sm:$0xff]
    %v267 = vld [vmem:[%s256 + $0x50] sm:$0xff]
    %v268 = vld [vmem:[%s256 + $0x58] sm:$0xff]
    %v269 = vmul.f32 %v119, %v257
    %v270 = vmul.f32 %v124, %v258
    %v271 = vmul.f32 %v129, %v259
    %v272 = vmul.f32 %v134, %v260
    %v273 = vmul.f32 %v139, %v261
    %v274 = vmul.f32 %v144, %v262
    %v275 = vmul.f32 %v149, %v263
    %v276 = vmul.f32 %v154, %v264
    %v277 = vmul.f32 %v159, %v265
    %v278 = vmul.f32 %v164, %v266
    %v279 = vmul.f32 %v169, %v267
    %v280 = vmul.f32 %v174, %v268
    %v281 = vsel %vm201, %v269, -inf
    %v282 = vsel %vm201, %v270, -inf
    %v283 = vmax.f32 %v281, %v282
    %v284 = vrot.slane %v283, 4
    %v285 = vmax.f32 %v283, %v284
    %v286 = vrot.slane %v285, 2
    %v287 = vmax.f32 %v285, %v286
    %v288 = vrot.slane %v287, 1
    %v289 = vmax.f32 %v287, %v288
    %v290 = vsel %vm201, %v271, -inf
    %v291 = vsel %vm201, %v272, -inf
    %v292 = vmax.f32 %v290, %v291
    %v293 = vrot.slane %v292, 4
    %v294 = vmax.f32 %v292, %v293
    %v295 = vrot.slane %v294, 2
    %v296 = vmax.f32 %v294, %v295
    %v297 = vrot.slane %v296, 1
    %v298 = vmax.f32 %v296, %v297
    %v299 = vsel %vm201, %v273, -inf
    %v300 = vsel %vm201, %v274, -inf
    %v301 = vmax.f32 %v299, %v300
    %v302 = vrot.slane %v301, 4
    %v303 = vmax.f32 %v301, %v302
    %v304 = vrot.slane %v303, 2
    %v305 = vmax.f32 %v303, %v304
    %v306 = vrot.slane %v305, 1
    %v307 = vmax.f32 %v305, %v306
    %v308 = vsel %vm201, %v275, -inf
    %v309 = vsel %vm201, %v276, -inf
    %v310 = vmax.f32 %v308, %v309
    %v311 = vrot.slane %v310, 4
    %v312 = vmax.f32 %v310, %v311
    %v313 = vrot.slane %v312, 2
    %v314 = vmax.f32 %v312, %v313
    %v315 = vrot.slane %v314, 1
    %v316 = vmax.f32 %v314, %v315
    %v317 = vsel %vm201, %v277, -inf
    %v318 = vsel %vm201, %v278, -inf
    %v319 = vmax.f32 %v317, %v318
    %v320 = vrot.slane %v319, 4
    %v321 = vmax.f32 %v319, %v320
    %v322 = vrot.slane %v321, 2
    %v323 = vmax.f32 %v321, %v322
    %v324 = vrot.slane %v323, 1
    %v325 = vmax.f32 %v323, %v324
    %v326 = vsel %vm201, %v279, -inf
    %v327 = vsel %vm201, %v280, -inf
    %v328 = vmax.f32 %v326, %v327
    %v329 = vrot.slane %v328, 4
    %v330 = vmax.f32 %v328, %v329
    %v331 = vrot.slane %v330, 2
    %v332 = vmax.f32 %v330, %v331
    %v333 = vrot.slane %v332, 1
    %v334 = vmax.f32 %v332, %v333
    %s335 = scalar_lea.vmem %s1, 192
    %v336 = vld [vmem:[%s335] sm:$0xff]
    %v337 = vld [vmem:[%s335 + $0x8] sm:$0xff]
    %v338 = vld [vmem:[%s335 + $0x10] sm:$0xff]
    %v339 = vld [vmem:[%s335 + $0x18] sm:$0xff]
    %v340 = vld [vmem:[%s335 + $0x20] sm:$0xff]
    %v341 = vld [vmem:[%s335 + $0x28] sm:$0xff]
    %v342 = vld [vmem:[%s335 + $0x30] sm:$0xff]
    %v343 = vld [vmem:[%s335 + $0x38] sm:$0xff]
    %v344 = vld [vmem:[%s335 + $0x40] sm:$0xff]
    %v345 = vld [vmem:[%s335 + $0x48] sm:$0xff]
    %v346 = vld [vmem:[%s335 + $0x50] sm:$0xff]
    %v347 = vld [vmem:[%s335 + $0x58] sm:$0xff]
    %v348 = vmul.f32 %v119, %v336
    %v349 = vmul.f32 %v124, %v337
    %v350 = vmul.f32 %v129, %v338
    %v351 = vmul.f32 %v134, %v339
    %v352 = vmul.f32 %v139, %v340
    %v353 = vmul.f32 %v144, %v341
    %v354 = vmul.f32 %v149, %v342
    %v355 = vmul.f32 %v154, %v343
    %v356 = vmul.f32 %v159, %v344
    %v357 = vmul.f32 %v164, %v345
    %v358 = vmul.f32 %v169, %v346
    %v359 = vmul.f32 %v174, %v347
    %v360 = vsel %vm201, %v348, -inf
    %v361 = vsel %vm201, %v349, -inf
    %v362 = vmax.f32 %v360, %v361
    %v363 = vrot.slane %v362, 4
    %v364 = vmax.f32 %v362, %v363
    %v365 = vrot.slane %v364, 2
    %v366 = vmax.f32 %v364, %v365
    %v367 = vrot.slane %v366, 1
    %v368 = vmax.f32 %v366, %v367
    %v369 = vsel %vm201, %v350, -inf
    %v370 = vsel %vm201, %v351, -inf
    %v371 = vmax.f32 %v369, %v370
    %v372 = vrot.slane %v371, 4
    %v373 = vmax.f32 %v371, %v372
    %v374 = vrot.slane %v373, 2
    %v375 = vmax.f32 %v373, %v374
    %v376 = vrot.slane %v375, 1
    %v377 = vmax.f32 %v375, %v376
    %v378 = vsel %vm201, %v352, -inf
    %v379 = vsel %vm201, %v353, -inf
    %v380 = vmax.f32 %v378, %v379
    %v381 = vrot.slane %v380, 4
    %v382 = vmax.f32 %v380, %v381
    %v383 = vrot.slane %v382, 2
    %v384 = vmax.f32 %v382, %v383
    %v385 = vrot.slane %v384, 1
    %v386 = vmax.f32 %v384, %v385
    %v387 = vsel %vm201, %v354, -inf
    %v388 = vsel %vm201, %v355, -inf
    %v389 = vmax.f32 %v387, %v388
    %v390 = vrot.slane %v389, 4
    %v391 = vmax.f32 %v389, %v390
    %v392 = vrot.slane %v391, 2
    %v393 = vmax.f32 %v391, %v392
    %v394 = vrot.slane %v393, 1
    %v395 = vmax.f32 %v393, %v394
    %v396 = vsel %vm201, %v356, -inf
    %v397 = vsel %vm201, %v357, -inf
    %v398 = vmax.f32 %v396, %v397
    %v399 = vrot.slane %v398, 4
    %v400 = vmax.f32 %v398, %v399
    %v401 = vrot.slane %v400, 2
    %v402 = vmax.f32 %v400, %v401
    %v403 = vrot.slane %v402, 1
    %v404 = vmax.f32 %v402, %v403
    %v405 = vsel %vm201, %v358, -inf
    %v406 = vsel %vm201, %v359, -inf
    %v407 = vmax.f32 %v405, %v406
    %v408 = vrot.slane %v407, 4
    %v409 = vmax.f32 %v407, %v408
    %v410 = vrot.slane %v409, 2
    %v411 = vmax.f32 %v409, %v410
    %v412 = vrot.slane %v411, 1
    %v413 = vmax.f32 %v411, %v412
    %vm420 = vcmask 1041409
    %v421 = vsel %vm420, %v219, %v210
    %vm422 = vcmask 1042434
    %v423 = vsel %vm422, %v228, %v421
    %vm424 = vcmask 1043459
    %v425 = vsel %vm424, %v237, %v423
    %vm426 = vcmask 1044484
    %v427 = vsel %vm426, %v246, %v425
    %vm428 = vcmask 1045509
    %v429 = vsel %vm428, %v255, %v427
    %v437 = vsel %vm420, %v298, %v289
    %v438 = vsel %vm422, %v307, %v437
    %v439 = vsel %vm424, %v316, %v438
    %v440 = vsel %vm426, %v325, %v439
    %v441 = vsel %vm428, %v334, %v440
    %442 = vrot.lane.b32.xlu0 %v441, 32
    %v443 = vpop.permute.xlu0 %442
    %v451 = vsel %vm420, %v377, %v368
    %v452 = vsel %vm422, %v386, %v451
    %v453 = vsel %vm424, %v395, %v452
    %v454 = vsel %vm426, %v404, %v453
    %v455 = vsel %vm428, %v413, %v454
    %456 = vrot.lane.b32.xlu0 %v455, 64
    %v457 = vpop.permute.xlu0 %456
    %v459 = vsel %vm201, %v429, %v443
    %vm460 = vcmask 523264
    %v461 = vsel %vm460, %v459, %v457
    %v462 = vld [vmem:[%s3] sm:$0x1]
    %v464 = vlaneseq
    %v465 = vshrl.u32 %v464, 7
    %v466 = vsub.s32 0, %v465
    %v467 = vrot.slane %v462, %v466
    %v469 = vadd.f32 %v461, %v467
    %v470 = vtanh.pop %v469
    %v471 = vld [vmem:[%s4] sm:$0xff]
    %v472 = vld [vmem:[%s4 + $0x8] sm:$0xff]
    %v473 = vld [vmem:[%s4 + $0x10] sm:$0xff]
    %v474 = vld [vmem:[%s4 + $0x18] sm:$0xff]
    %v475 = vld [vmem:[%s4 + $0x20] sm:$0xff]
    %v476 = vld [vmem:[%s4 + $0x28] sm:$0xff]
    %v477 = vld [vmem:[%s4 + $0x30] sm:$0xff]
    %v478 = vld [vmem:[%s4 + $0x38] sm:$0xff]
    %v479 = vld [vmem:[%s4 + $0x40] sm:$0xff]
    %v480 = vld [vmem:[%s4 + $0x48] sm:$0xff]
    %v481 = vld [vmem:[%s4 + $0x50] sm:$0xff]
    %v482 = vld [vmem:[%s4 + $0x58] sm:$0xff]
    %v483 = vld [vmem:[%s5] sm:$0x1]
    %v485 = vlaneseq
    %v486 = vshrl.u32 %v485, 7
    %v487 = vsub.s32 0, %v486
    %v488 = vrot.slane %v483, %v487
    %vm490 = vcmask 785408
    %v492 = vsel %vm490, %v470, 0
    %494 = vmatprep.subr.mxu0 0.0
    %495 = vmatpush1.msra.mxu0 %v471
    %496 = vmatprep.subr.mxu0 0.0
    %497 = vmatpush1.msra.mxu0 %v472
    %498 = vmatprep.subr.mxu0 0.0
    %499 = vmatpush1.msra.mxu0 %v473
    %500 = vmatprep.subr.mxu0 0.0
    %501 = vmatpush1.msra.mxu0 %v474
    %502 = vmatprep.subr.mxu0 0.0
    %503 = vmatpush1.msra.mxu0 %v475
    %504 = vmatprep.subr.mxu0 0.0
    %505 = vmatpush1.msra.mxu0 %v476
    %506 = vmatprep.subr.mxu0 0.0
    %507 = vmatpush1.msra.mxu0 %v477
    %508 = vmatprep.subr.mxu0 0.0
    %509 = vmatpush1.msra.mxu0 %v478
    %510 = vmatprep.subr.mxu0 0.0
    %511 = vmatpush1.msra.mxu0 %v479
    %512 = vmatprep.subr.mxu0 0.0
    %513 = vmatpush1.msra.mxu0 %v480
    %514 = vmatprep.subr.mxu0 0.0
    %515 = vmatpush1.msra.mxu0 %v481
    %516 = vmatprep.subr.mxu0 0.0
    %517 = vmatpush1.msra.mxu0 %v482
    %518 = vmatprep.subr.mxu0 0.0
    %519 = vmatpush1.msra.mxu0 0.0
    %520 = vmatprep.subr.mxu0 0.0
    %521 = vmatpush1.msra.mxu0 0.0
    %522 = vmatprep.subr.mxu0 0.0
    %523 = vmatpush1.msra.mxu0 0.0
    %524 = vmatprep.subr.mxu0 0.0
    %525 = vmatpush1.msra.mxu0 0.0
    %526 = vmatprep.subr.mxu0 0.0
    %527 = vmatpush1.msra.mxu0 0.0
    %528 = vmatprep.subr.mxu0 0.0
    %529 = vmatpush1.msra.mxu0 0.0
    %530 = vmatprep.subr.mxu0 0.0
    %531 = vmatpush1.msra.mxu0 0.0
    %532 = vmatprep.subr.mxu0 0.0
    %533 = vmatpush1.msra.mxu0 0.0
    %534 = vmatprep.subr.mxu0 0.0
    %535 = vmatpush1.msra.mxu0 0.0
    %536 = vmatprep.subr.mxu0 0.0
    %537 = vmatpush1.msra.mxu0 0.0
    %538 = vmatprep.subr.mxu0 0.0
    %539 = vmatpush1.msra.mxu0 0.0
    %540 = vmatprep.subr.mxu0 0.0
    %541 = vmatpush1.msra.mxu0 0.0
    %542 = vmatprep.subr.mxu0 0.0
    %543 = vmatpush1.msra.mxu0 0.0
    %544 = vmatprep.subr.mxu0 0.0
    %545 = vmatpush1.msra.mxu0 0.0
    %546 = vmatprep.subr.mxu0 0.0
    %547 = vmatpush1.msra.mxu0 0.0
    %548 = vmatprep.subr.mxu0 0.0
    %549 = vmatpush1.msra.mxu0 0.0
    %550 = vmatprep.subr.mxu0 0.0
    %551 = vmatpush1.msra.mxu0 0.0
    %552 = vmatprep.subr.mxu0 0.0
    %553 = vmatpush1.msra.mxu0 0.0
    %554 = vmatprep.subr.mxu0 0.0
    %555 = vmatpush1.msra.mxu0 0.0
    %556 = vmatprep.subr.mxu0 0.0
    %557 = vmatpush1.msra.mxu0 0.0
    %558 = vmatprep.mubr.f32.mxu0 0.0
    %559 = vmatmul.mubr.f32.gmra.mrb[0].mxu0 %v492
    %v560 = vpop.f32.mrb[0].mxu0
    %v561 = vadd.f32 %v488, %v560
    %v562 = vpop.f32.mrb[0].mxu0
    %563 = vdwg.mxu0
    %vm564 = vcmask 62464
    %v565 = vsel %vm564, %v561, -inf
    %566 = vmax.xlane.f32.xlu0 %v565
    %v567 = vpop.xlane.xlu0 %566
    %v568 = vsub.f32 %v561, %v567
    %v569 = vmul.f32 %v568, 1.442695
    %v570 = vpow.pop %v569
    %v571 = vsel %vm564, %v570, 0.0
    %572 = vadd.xlane.f32.xlu0 %v571
    %v573 = vpop.xlane.xlu0 %572
    %v574 = vlog2.pop %v573
    %v575 = vmul.f32 %v574, 0.6931472
    %v576 = vsub.f32 %v568, %v575
    %v578 = vcombine.high %v576, %v576
    %v580 = vunpack.c.l.s4 1966171168
    %v581 = vunpack.c.0.s8 %v580
    %v582 = vlaneseq
    %v583 = vshrl.u32 %v582, 7
    %v584 = vsub.s32 %v581, %v583
    %v585 = vrot.slane %v576, %v584
    %v587 = vunpack.c.l.s4 1966171168
    %v588 = vunpack.c.0.s8 %v587
    %v589 = vlaneseq
    %v590 = vshrl.u32 %v589, 7
    %v591 = vsub.s32 %v588, %v590
    %v592 = vrot.slane %v578, %v591
    %v593 = vcombine.high %v585, %v585
    %v594 = vcombine.high %v592, %v592
    %v596 = vunpack.c.l.s4 1966171168
    %v597 = vunpack.c.0.s8 %v596
    %v598 = vlaneseq
    %v599 = vshrl.u32 %v598, 7
    %v600 = vsub.s32 %v597, %v599
    %v601 = vrot.slane %v585, %v600
    %v603 = vunpack.c.l.s4 1966171168
    %v604 = vunpack.c.0.s8 %v603
    %v605 = vlaneseq
    %v606 = vshrl.u32 %v605, 7
    %v607 = vsub.s32 %v604, %v606
    %v608 = vrot.slane %v592, %v607
    %v610 = vunpack.c.l.s4 1966171168
    %v611 = vunpack.c.0.s8 %v610
    %v612 = vlaneseq
    %v613 = vshrl.u32 %v612, 7
    %v614 = vsub.s32 %v611, %v613
    %v615 = vrot.slane %v593, %v614
    %v617 = vunpack.c.l.s4 1966171168
    %v618 = vunpack.c.0.s8 %v617
    %v619 = vlaneseq
    %v620 = vshrl.u32 %v619, 7
    %v621 = vsub.s32 %v618, %v620
    %v622 = vrot.slane %v594, %v621
    %v623 = vcombine.high %v601, %v601
    %v624 = vcombine.high %v615, %v615
    %v625 = vcombine.low %v601, %v615
    %v627 = vunpack.c.l.s4 1966171168
    %v628 = vunpack.c.0.s8 %v627
    %v629 = vlaneseq
    %v630 = vshrl.u32 %v629, 7
    %v631 = vsub.s32 %v628, %v630
    %v632 = vrot.slane %v625, %v631
    %v634 = vunpack.c.l.s4 1966171168
    %v635 = vunpack.c.0.s8 %v634
    %v636 = vlaneseq
    %v637 = vshrl.u32 %v636, 7
    %v638 = vsub.s32 %v635, %v637
    %v639 = vrot.slane %v623, %v638
    %v640 = vcombine.low %v632, %v639
    %v642 = vunpack.c.l.s4 1966171168
    %v643 = vunpack.c.0.s8 %v642
    %v644 = vlaneseq
    %v645 = vshrl.u32 %v644, 7
    %v646 = vsub.s32 %v643, %v645
    %v647 = vrot.slane %v640, %v646
    %v648 = vcombine.low %v624, %v608
    %v650 = vunpack.c.l.s4 1966171168
    %v651 = vunpack.c.0.s8 %v650
    %v652 = vlaneseq
    %v653 = vshrl.u32 %v652, 7
    %v654 = vsub.s32 %v651, %v653
    %v655 = vrot.slane %v648, %v654
    %v657 = vunpack.c.l.s4 1966171168
    %v658 = vunpack.c.0.s8 %v657
    %v659 = vlaneseq
    %v660 = vshrl.u32 %v659, 7
    %v661 = vsub.s32 %v658, %v660
    %v662 = vrot.slane %v622, %v661
    %v663 = vcombine.low %v655, %v662
    %v665 = vunpack.c.l.s4 1966171168
    %v666 = vunpack.c.0.s8 %v665
    %v667 = vlaneseq
    %v668 = vshrl.u32 %v667, 7
    %v669 = vsub.s32 %v666, %v668
    %v670 = vrot.slane %v663, %v669
    %vm673 = vcmask 59392
    %v674 = vsel %vm673, %v647, -inf
    %v675 = vrot.slane %v674, 4
    %v676 = vmax.f32 %v674, %v675
    %v677 = vrot.slane %v676, 2
    %v678 = vmax.f32 %v676, %v677
    %v679 = vrot.slane %v678, 1
    %v680 = vmax.f32 %v678, %v679
    %v681 = vsel %vm673, %v670, -inf
    %v682 = vrot.slane %v681, 4
    %v683 = vmax.f32 %v681, %v682
    %v684 = vrot.slane %v683, 2
    %v685 = vmax.f32 %v683, %v684
    %v686 = vrot.slane %v685, 1
    %v687 = vmax.f32 %v685, %v686
    %v690 = vsel %vm420, %v687, %v680
    %vm692 = vcmask 58368
    %693 = vst.msk [vmem:[#allocation2] sm:$0x3] %vm692, %v690
    // Predicated region
    $region26: #{pcnn_one_forward.1} parent=1 // pred_check
      _
    $region27: #{pcnn_one_forward.1} parent=1 // pred_check_branch
      %695 = sbr.rel (0) target = $region29
    $region28: #{pcnn_one_forward.1} parent=1 // pred_region
      %s697 = ssub.s32 32, 32
      %698 = vsyncadd [#allocation3], %s697
      %s700 = sshll.u32 [#allocation2], 4
      %s701 = int_to_ptr.vmem [resolvable:$true] %s700
      %703 = dma.vmem_to_hbm [thread:$0]  %s701, 32, %s6, [#allocation3]
    $region29: #{pcnn_one_forward.1} parent=1 // pred_fallthru
      _
    // Predicated region
    $region30: #{pcnn_one_forward.1} parent=1 // pred_check
      _
    $region31: #{pcnn_one_forward.1} parent=1 // pred_check_branch
      %705 = sbr.rel (0) target = $region33
    $region32: #{pcnn_one_forward.1} parent=1 // pred_region
      %706 = dma.done [#allocation3], 32
    $region33: #{pcnn_one_forward.1} parent=1 // pred_fallthru
      _
    %707 = vsyncpa [#allocation3], 1

</llo_original>
